<compile_context>
chip_gen: v7x
topology: tpu7x:2x2x1
jax: 0.10.0
libtpu: 0.0.40
codegen_flags: <defaults>
</compile_context>

<pallas_src>
import numpy as np
import jax
import jax.numpy as jnp
from jax.experimental import pallas as pl
from jax.experimental.pallas import tpu as pltpu


def _round_up(x, m):
    return (x + m - 1) // m * m


def _mlp_kernel(x_ref, w_ref, b_ref, o_ref):
    # x_ref: (tm, tk) operand dtype   w_ref: (tk, tn) operand dtype
    # b_ref: (1, tn) f32              o_ref: (tm, tn) f32 (VMEM-resident across K axis)
    k = pl.program_id(2)

    @pl.when(k == 0)
    def _():
        # Initialize the accumulator tile with the folded-BN bias instead of zeros,
        # so the final step only needs the ReLU.
        o_ref[...] = jnp.broadcast_to(b_ref[...], o_ref.shape)

    o_ref[...] += jnp.dot(x_ref[...], w_ref[...],
                          preferred_element_type=jnp.float32)

    @pl.when(k == pl.num_programs(2) - 1)
    def _():
        o_ref[...] = jnp.maximum(o_ref[...], 0.0)


def fold_bn_into_linear(w_pt, b_pt, gamma, beta, running_mean, running_var, eps=1e-5):
    """Fold eval-mode BatchNorm1d into the Linear layer.

    w_pt: (out_features, in_features)  -- torch nn.Linear layout
    returns (w_folded (in, out), b_folded (out,)) such that
      relu(bn(linear(x))) == relu(x @ w_folded + b_folded)
    """
    scale = gamma / jnp.sqrt(running_var + eps)                 # (out,)
    w_folded = (w_pt * scale[:, None]).T                        # (in, out)
    b_folded = scale * (b_pt - running_mean) + beta             # (out,)
    return w_folded, b_folded


class FusedMLP:
    """Fused Linear + (folded) BatchNorm1d + ReLU.

    Weight prep (cast + pad to tile multiples) happens once here, not per call.
    """

    def __init__(self, w_folded, b_folded, *, dropout=0.0,
                 tm=256, tn=512, tk=1024,
                 operand_dtype=jnp.bfloat16, vmem_limit_bytes=None):
        del dropout  # eval-mode Dropout is the identity (see TODO above).
        K, F = w_folded.shape
        self.K, self.F = K, F
        self.operand_dtype = operand_dtype
        self.vmem_limit_bytes = vmem_limit_bytes

        # Clamp tiles to the (padded) problem, respecting the (8, 128) constraint.
        self.tn = min(tn, _round_up(F, 128))
        self.tk = min(tk, _round_up(K, 128))
        self.tm_pref = tm

        self.Kp = _round_up(K, self.tk)
        self.Fp = _round_up(F, self.tn)

        # One-time prep: cast the weights to the MXU operand dtype and zero-pad to
        # tile multiples (zeros along K contribute nothing; padded F columns are
        # sliced off after the kernel).  The bias stays f32 (it seeds the accumulator).
        self.w = jnp.pad(jnp.asarray(w_folded).astype(operand_dtype),
                         ((0, self.Kp - K), (0, self.Fp - F)))
        self.b = jnp.pad(jnp.asarray(b_folded).astype(jnp.float32).reshape(1, F),
                         ((0, 0), (0, self.Fp - F)))

    def __call__(self, x):
        N, K = x.shape
        assert K == self.K, (K, self.K)

        tm = min(self.tm_pref, _round_up(N, 8))
        Np = _round_up(N, tm)

        xp = x.astype(self.operand_dtype)
        if Np != N or self.Kp != K:
            xp = jnp.pad(xp, ((0, Np - N), (0, self.Kp - K)))

        grid = (Np // tm, self.Fp // self.tn, self.Kp // self.tk)

        cp_kwargs = dict(dimension_semantics=("parallel", "parallel", "arbitrary"))
        if self.vmem_limit_bytes is not None:
            cp_kwargs["vmem_limit_bytes"] = self.vmem_limit_bytes

        out = pl.pallas_call(
            _mlp_kernel,
            out_shape=jax.ShapeDtypeStruct((Np, self.Fp), jnp.float32),
            grid_spec=pltpu.PrefetchScalarGridSpec(
                num_scalar_prefetch=0,
                grid=grid,
                in_specs=[
                    pl.BlockSpec((tm, self.tk), lambda i, j, k: (i, k)),      # activations
                    pl.BlockSpec((self.tk, self.tn), lambda i, j, k: (k, j)),  # folded weights
                    pl.BlockSpec((1, self.tn), lambda i, j, k: (0, j)),        # folded bias
                ],
                out_specs=pl.BlockSpec((tm, self.tn), lambda i, j, k: (i, j)),
            ),
            compiler_params=pltpu.CompilerParams(**cp_kwargs),
        )(xp, self.w, self.b)

        return out[:N, :self.F]


def reference(x, w_folded, b_folded):
    """Plain-JAX reference with the same (folded) math."""
    return jnp.maximum(x.astype(jnp.float32) @ w_folded + b_folded, 0.0)


if __name__ == "__main__":
    # Small shapes consistent with the module: batch=16, in_features=32, out_features=128.
    N, in_features, out_features = 16, 32, 128
    dropout = 0.0   # eval-mode Dropout is the identity anyway.

    key = jax.random.PRNGKey(0)
    kx, kw, kb, kg, kbe, km, kv = jax.random.split(key, 7)

    x = jax.random.normal(kx, (N, in_features), jnp.float32)

    # torch nn.Linear layout: weight (out_features, in_features), bias (out_features,)
    w_pt = jax.random.normal(kw, (out_features, in_features), jnp.float32) * np.sqrt(
        1.0 / in_features)
    b_pt = jax.random.normal(kb, (out_features,), jnp.float32) * 0.05

    # BatchNorm1d parameters / running statistics (eval mode).
    gamma = jax.random.uniform(kg, (out_features,), jnp.float32, 0.5, 1.5)
    beta = jax.random.normal(kbe, (out_features,), jnp.float32) * 0.1
    running_mean = jax.random.normal(km, (out_features,), jnp.float32) * 0.1
    running_var = jax.random.uniform(kv, (out_features,), jnp.float32, 0.5, 1.5)

    w_folded, b_folded = fold_bn_into_linear(
        w_pt, b_pt, gamma, beta, running_mean, running_var, eps=1e-5)

    ref = reference(x, w_folded, b_folded)

    # f32 operand path: tight numerical check.
    mlp_f32 = FusedMLP(w_folded, b_folded, dropout=dropout, operand_dtype=jnp.float32)
    out_f32 = jax.block_until_ready(mlp_f32(x))
    np.testing.assert_allclose(np.asarray(out_f32), np.asarray(ref), rtol=1e-4, atol=1e-4)

    # bf16 operand path (default fast path: half the HBM operand traffic): looser check.
    mlp_bf16 = FusedMLP(w_folded, b_folded, dropout=dropout, operand_dtype=jnp.bfloat16)
    out_bf16 = jax.block_until_ready(mlp_bf16(x))
    np.testing.assert_allclose(np.asarray(out_bf16), np.asarray(ref), rtol=5e-2, atol=5e-2)

    assert out_f32.shape == (N, out_features)
    assert out_bf16.shape == (N, out_features)
    print("KERNEL_OK")
</pallas_src>

<mosaic_0001>
module attributes {stable_mosaic.version = 11 : i64} {
  func.func @_mlp_kernel(%arg0: i32, %arg1: i32, %arg2: i32, %arg3: memref<16x128xf32, #tpu.memory_space<vmem>>, %arg4: memref<128x128xf32, #tpu.memory_space<vmem>>, %arg5: memref<1x128xf32, #tpu.memory_space<vmem>>, %arg6: memref<16x128xf32, #tpu.memory_space<vmem>>) attributes {dimension_semantics = [#tpu.dimension_semantics<parallel>, #tpu.dimension_semantics<parallel>, #tpu.dimension_semantics<arbitrary>], iteration_bounds = array<i64: 1, 1, 1>, scalar_prefetch = 0 : i64, scratch_operands = 0 : i64, tpu.core_type = #tpu.core_type<tc>, window_params = [{transform_indices = @transform_0, window_bounds = array<i64: 16, 128>}, {transform_indices = @transform_1, window_bounds = array<i64: 128, 128>}, {transform_indices = @transform_2, window_bounds = array<i64: 1, 128>}, {transform_indices = @transform_3, window_bounds = array<i64: 16, 128>}]} {
    %c0_i32 = arith.constant 0 : i32
    %0 = arith.cmpi eq, %arg2, %c0_i32 : i32
    %1 = arith.extui %0 : i1 to i32
    %c0_i32_0 = arith.constant 0 : i32
    %2 = arith.cmpi ne, %1, %c0_i32_0 : i32
    scf.if %2 {
      %c0_10 = arith.constant 0 : index
      %c0_11 = arith.constant 0 : index
      %12 = vector.load %arg5[%c0_10, %c0_11] : memref<1x128xf32, #tpu.memory_space<vmem>>, vector<1x128xf32>
      %13 = vector.shape_cast %12 : vector<1x128xf32> to vector<1x128xf32>
      %14 = vector.broadcast %13 : vector<1x128xf32> to vector<16x128xf32>
      %c0_12 = arith.constant 0 : index
      %c0_13 = arith.constant 0 : index
      %15 = vector.load %arg6[%c0_12, %c0_13] : memref<16x128xf32, #tpu.memory_space<vmem>>, vector<16x128xf32>
      tpu.vector_store %arg6[%c0_12, %c0_13], %14 {strides = array<i32>} : memref<16x128xf32, #tpu.memory_space<vmem>>, vector<16x128xf32>,
    } else {
    }
    %c0 = arith.constant 0 : index
    %c0_1 = arith.constant 0 : index
    %3 = vector.load %arg6[%c0, %c0_1] : memref<16x128xf32, #tpu.memory_space<vmem>>, vector<16x128xf32>
    %c0_2 = arith.constant 0 : index
    %c0_3 = arith.constant 0 : index
    %4 = vector.load %arg3[%c0_2, %c0_3] : memref<16x128xf32, #tpu.memory_space<vmem>>, vector<16x128xf32>
    %c0_4 = arith.constant 0 : index
    %c0_5 = arith.constant 0 : index
    %5 = vector.load %arg4[%c0_4, %c0_5] : memref<128x128xf32, #tpu.memory_space<vmem>>, vector<128x128xf32>
    %cst = arith.constant dense<0.000000e+00> : vector<16x128xf32>
    %6 = tpu.matmul %4, %5, %cst {dimension_numbers = #tpu.dot_dimension_numbers<[1], [0], [0], [1], [0, 0, 1, 1], [], []>} : vector<16x128xf32>, vector<128x128xf32>, vector<16x128xf32> -> vector<16x128xf32>
    %7 = arith.addf %3, %6 : vector<16x128xf32>
    %c0_6 = arith.constant 0 : index
    %c0_7 = arith.constant 0 : index
    %8 = vector.load %arg6[%c0_6, %c0_7] : memref<16x128xf32, #tpu.memory_space<vmem>>, vector<16x128xf32>
    tpu.vector_store %arg6[%c0_6, %c0_7], %7 {strides = array<i32>} : memref<16x128xf32, #tpu.memory_space<vmem>>, vector<16x128xf32>,
    %c0_i32_8 = arith.constant 0 : i32
    %9 = arith.cmpi eq, %arg2, %c0_i32_8 : i32
    %10 = arith.extui %9 : i1 to i32
    %c0_i32_9 = arith.constant 0 : i32
    %11 = arith.cmpi ne, %10, %c0_i32_9 : i32
    scf.if %11 {
      %c0_10 = arith.constant 0 : index
      %c0_11 = arith.constant 0 : index
      %12 = vector.load %arg6[%c0_10, %c0_11] : memref<16x128xf32, #tpu.memory_space<vmem>>, vector<16x128xf32>
      %cst_12 = arith.constant 0.000000e+00 : f32
      %13 = vector.broadcast %cst_12 : f32 to vector<16x128xf32>
      %14 = arith.maximumf %12, %13 : vector<16x128xf32>
      %c0_13 = arith.constant 0 : index
      %c0_14 = arith.constant 0 : index
      %15 = vector.load %arg6[%c0_13, %c0_14] : memref<16x128xf32, #tpu.memory_space<vmem>>, vector<16x128xf32>
      tpu.vector_store %arg6[%c0_13, %c0_14], %14 {strides = array<i32>} : memref<16x128xf32, #tpu.memory_space<vmem>>, vector<16x128xf32>,
    } else {
    }
    return
  }
  func.func @transform_0(%arg0: i32, %arg1: i32, %arg2: i32) -> (i32, i32) {
    %c0_i32 = arith.constant 0 : i32
    return %arg0, %arg2 : i32, i32
  }
  func.func @transform_1(%arg0: i32, %arg1: i32, %arg2: i32) -> (i32, i32) {
    %c0_i32 = arith.constant 0 : i32
    return %arg2, %arg1 : i32, i32
  }
  func.func @transform_2(%arg0: i32, %arg1: i32, %arg2: i32) -> (i32, i32) {
    %c0_i32 = arith.constant 0 : i32
    %c0_i32_0 = arith.constant 0 : i32
    return %c0_i32, %arg1 : i32, i32
  }
  func.func @transform_3(%arg0: i32, %arg1: i32, %arg2: i32) -> (i32, i32) {
    %c0_i32 = arith.constant 0 : i32
    return %arg0, %arg1 : i32, i32
  }
}

</mosaic_0001>

<llo_original>
// kernel: tpu_custom_call.1
$region0: #{tpu_custom_call.1}
  #allocation0 [shape = 'u32[]', space=smem, size = 0x4, offset = 0x4, fixed_abs, tag = 'smem constant byte address 0x4 - core index']
  #allocation1 [shape = 'u32[144,128]{1,0:T(1,128)}', space=vmem, size = 0x12000, scoped, tag = 'internal scratch']
  %s0 = inlined_call_operand.hbm [shape: f32[16,128], index: 0, kind: input, shape index: {}]
  %s1 = inlined_call_operand.hbm [shape: f32[128,128], index: 1, kind: input, shape index: {}]
  %s2 = inlined_call_operand.vmem [shape: f32[1,128], index: 2, kind: input, shape index: {}]
  %s3 = inlined_call_operand.hbm [shape: f32[16,128], index: 3, kind: output, shape index: {}]
  %s4 = sld [smem:[#allocation0]]
  $region38: #{tpu_custom_call.1} parent=0
    _
  %s6 = ssub.s32 1, %s4
  %s7 = scalar_select 0, %s6, %s4
  $region1: #{tpu_custom_call.1} parent=0
    #allocation2 [shape = 'u8[8192]{0}', space=vmem, size = 0x2000, scoped, tag = 'input window, operand 0, single buffered']
    #allocation3 [shape = 's32[1]{0}', space=sflag, size = 0x4, scoped, tag = 'scoped memory for tpu_custom_call.1']
    #allocation4 [shape = 's32[1]{0}', space=sflag, size = 0x4, scoped, tag = 'scoped memory for tpu_custom_call.1']
    #allocation5 [shape = 'u8[65536]{0}', space=vmem, size = 0x10000, scoped, tag = 'input window, operand 1, single buffered']
    #allocation6 [shape = 's32[1]{0}', space=sflag, size = 0x4, scoped, tag = 'scoped memory for tpu_custom_call.1']
    #allocation7 [shape = 'u8[8192]{0}', space=vmem, size = 0x2000, scoped, tag = 'output window, operand 0, single buffered']
    %8 = vsyncpa [#allocation3], 0
    %9 = vsyncpa [#allocation6], 0
    %10 = vsyncpa [#allocation4], 0
    // Predicated region
    $region2: #{tpu_custom_call.1} parent=1 // pred_check
      _
    $region3: #{tpu_custom_call.1} parent=1 // pred_check_branch
      %12 = sbr.rel (0) target = $region5
    $region4: #{tpu_custom_call.1} parent=1 // pred_region
      %s14 = ssub.s32 256, 256
      %15 = vsyncadd [#allocation3], %s14
      %s16 = sshll.u32 [#allocation2], 4
      %s17 = int_to_ptr.vmem [resolvable:$true] %s16
      %22 = dma.hbm_to_vmem [thread:$0]  %s0, 256, %s17, [#allocation3], 128, 128, 8
    $region5: #{tpu_custom_call.1} parent=1 // pred_fallthru
      _
    // Predicated region
    $region6: #{tpu_custom_call.1} parent=1 // pred_check
      _
    $region7: #{tpu_custom_call.1} parent=1 // pred_check_branch
      %24 = sbr.rel (0) target = $region9
    $region8: #{tpu_custom_call.1} parent=1 // pred_region
      %s26 = ssub.s32 2048, 2048
      %27 = vsyncadd [#allocation6], %s26
      %s28 = sshll.u32 [#allocation5], 4
      %s29 = int_to_ptr.vmem [resolvable:$true] %s28
      %34 = dma.hbm_to_vmem [thread:$0]  %s1, 2048, %s29, [#allocation6], 128, 128, 8
    $region9: #{tpu_custom_call.1} parent=1 // pred_fallthru
      _
    // Predicated region
    $region10: #{tpu_custom_call.1} parent=1 // pred_check
      _
    $region11: #{tpu_custom_call.1} parent=1 // pred_check_branch
      %36 = sbr.rel (0) target = $region13
    $region12: #{tpu_custom_call.1} parent=1 // pred_region
      _
    $region13: #{tpu_custom_call.1} parent=1 // pred_fallthru
      _
    // Predicated region
    $region14: #{tpu_custom_call.1} parent=1 // pred_check
      _
    $region15: #{tpu_custom_call.1} parent=1 // pred_check_branch
      %38 = sbr.rel (0) target = $region17
    $region16: #{tpu_custom_call.1} parent=1 // pred_region
      %39 = dma.done [#allocation3], 256
    $region17: #{tpu_custom_call.1} parent=1 // pred_fallthru
      _
    // Predicated region
    $region18: #{tpu_custom_call.1} parent=1 // pred_check
      _
    $region19: #{tpu_custom_call.1} parent=1 // pred_check_branch
      %41 = sbr.rel (0) target = $region21
    $region20: #{tpu_custom_call.1} parent=1 // pred_region
      %42 = dma.done [#allocation6], 2048
    $region21: #{tpu_custom_call.1} parent=1 // pred_fallthru
      _
    %p43 = scmp.eq.s32.totalorder 0, 0
    // Predicated region
    $region22: #{tpu_custom_call.1} parent=1 // pred_check
      %p44 = pneg %p43
    $region23: #{tpu_custom_call.1} parent=1 // pred_check_branch
      %46 = sbr.rel (%p44) target = $region25
    $region24: #{tpu_custom_call.1} parent=1 // pred_region
      %v47 = vld [vmem:[%s2] sm:$0x1]
      %v49 = vlaneseq
      %v50 = vshrl.u32 %v49, 7
      %v51 = vsub.s32 0, %v50
      %v52 = vrot.slane %v47, %v51
      %54 = vst [vmem:[#allocation7] sm:$0xff] %v52
      %55 = vst [vmem:[#allocation7 + $0x8] sm:$0xff] %v52
    $region25: #{tpu_custom_call.1} parent=1 // pred_fallthru
      _
    %v56 = vld [vmem:[#allocation7] sm:$0xff]
    %v57 = vld [vmem:[#allocation7 + $0x8] sm:$0xff]
    %v58 = vld [vmem:[#allocation2] sm:$0xff]
    %v59 = vld [vmem:[#allocation2 + $0x8] sm:$0xff]
    %v60 = vld [vmem:[#allocation5] sm:$0xff]
    %v61 = vld [vmem:[#allocation5 + $0x8] sm:$0xff]
    %v62 = vld [vmem:[#allocation5 + $0x10] sm:$0xff]
    %v63 = vld [vmem:[#allocation5 + $0x18] sm:$0xff]
    %v64 = vld [vmem:[#allocation5 + $0x20] sm:$0xff]
    %v65 = vld [vmem:[#allocation5 + $0x28] sm:$0xff]
    %v66 = vld [vmem:[#allocation5 + $0x30] sm:$0xff]
    %v67 = vld [vmem:[#allocation5 + $0x38] sm:$0xff]
    %v68 = vld [vmem:[#allocation5 + $0x40] sm:$0xff]
    %v69 = vld [vmem:[#allocation5 + $0x48] sm:$0xff]
    %v70 = vld [vmem:[#allocation5 + $0x50] sm:$0xff]
    %v71 = vld [vmem:[#allocation5 + $0x58] sm:$0xff]
    %v72 = vld [vmem:[#allocation5 + $0x60] sm:$0xff]
    %v73 = vld [vmem:[#allocation5 + $0x68] sm:$0xff]
    %v74 = vld [vmem:[#allocation5 + $0x70] sm:$0xff]
    %v75 = vld [vmem:[#allocation5 + $0x78] sm:$0xff]
    %76 = vmatprep.subr.mxu0 0.0
    %77 = vmatpush1.msra.mxu0 %v60
    %78 = vmatprep.subr.mxu0 0.0
    %79 = vmatpush1.msra.mxu0 %v61
    %80 = vmatprep.subr.mxu0 0.0
    %81 = vmatpush1.msra.mxu0 %v62
    %82 = vmatprep.subr.mxu0 0.0
    %83 = vmatpush1.msra.mxu0 %v63
    %84 = vmatprep.subr.mxu0 0.0
    %85 = vmatpush1.msra.mxu0 %v64
    %86 = vmatprep.subr.mxu0 0.0
    %87 = vmatpush1.msra.mxu0 %v65
    %88 = vmatprep.subr.mxu0 0.0
    %89 = vmatpush1.msra.mxu0 %v66
    %90 = vmatprep.subr.mxu0 0.0
    %91 = vmatpush1.msra.mxu0 %v67
    %92 = vmatprep.subr.mxu0 0.0
    %93 = vmatpush1.msra.mxu0 %v68
    %94 = vmatprep.subr.mxu0 0.0
    %95 = vmatpush1.msra.mxu0 %v69
    %96 = vmatprep.subr.mxu0 0.0
    %97 = vmatpush1.msra.mxu0 %v70
    %98 = vmatprep.subr.mxu0 0.0
    %99 = vmatpush1.msra.mxu0 %v71
    %100 = vmatprep.subr.mxu0 0.0
    %101 = vmatpush1.msra.mxu0 %v72
    %102 = vmatprep.subr.mxu0 0.0
    %103 = vmatpush1.msra.mxu0 %v73
    %104 = vmatprep.subr.mxu0 0.0
    %105 = vmatpush1.msra.mxu0 %v74
    %106 = vmatprep.subr.mxu0 0.0
    %107 = vmatpush1.msra.mxu0 %v75
    %108 = vmatprep.subr.mxu0 0.0
    %109 = vmatpush1.msra.mxu0 0.0
    %110 = vmatprep.subr.mxu0 0.0
    %111 = vmatpush1.msra.mxu0 0.0
    %112 = vmatprep.subr.mxu0 0.0
    %113 = vmatpush1.msra.mxu0 0.0
    %114 = vmatprep.subr.mxu0 0.0
    %115 = vmatpush1.msra.mxu0 0.0
    %116 = vmatprep.subr.mxu0 0.0
    %117 = vmatpush1.msra.mxu0 0.0
    %118 = vmatprep.subr.mxu0 0.0
    %119 = vmatpush1.msra.mxu0 0.0
    %120 = vmatprep.subr.mxu0 0.0
    %121 = vmatpush1.msra.mxu0 0.0
    %122 = vmatprep.subr.mxu0 0.0
    %123 = vmatpush1.msra.mxu0 0.0
    %124 = vmatprep.subr.mxu0 0.0
    %125 = vmatpush1.msra.mxu0 0.0
    %126 = vmatprep.subr.mxu0 0.0
    %127 = vmatpush1.msra.mxu0 0.0
    %128 = vmatprep.subr.mxu0 0.0
    %129 = vmatpush1.msra.mxu0 0.0
    %130 = vmatprep.subr.mxu0 0.0
    %131 = vmatpush1.msra.mxu0 0.0
    %132 = vmatprep.subr.mxu0 0.0
    %133 = vmatpush1.msra.mxu0 0.0
    %134 = vmatprep.subr.mxu0 0.0
    %135 = vmatpush1.msra.mxu0 0.0
    %136 = vmatprep.subr.mxu0 0.0
    %137 = vmatpush1.msra.mxu0 0.0
    %138 = vmatprep.subr.mxu0 0.0
    %139 = vmatpush1.msra.mxu0 0.0
    %140 = vmatprep.mubr.f32.mxu0 0.0
    %141 = vmatmul.mubr.f32.gmra.mrb[0].mxu0 %v58
    %v142 = vpop.f32.mrb[0].mxu0
    %v143 = vadd.f32 0.0, %v142
    %v144 = vpop.f32.mrb[0].mxu0
    %145 = vmatprep.mubr.f32.mxu0 0.0
    %146 = vmatmul.mubr.f32.gmra.mrb[0].mxu0 %v59
    %v147 = vpop.f32.mrb[0].mxu0
    %v148 = vadd.f32 0.0, %v147
    %v149 = vpop.f32.mrb[0].mxu0
    %150 = vdwg.mxu0
    %v151 = vadd.f32 %v56, %v143
    %v152 = vadd.f32 %v57, %v148
    %153 = vst [vmem:[#allocation7] sm:$0xff] %v151
    %154 = vst [vmem:[#allocation7 + $0x8] sm:$0xff] %v152
    // Predicated region
    $region26: #{tpu_custom_call.1} parent=1 // pred_check
      %p155 = pneg %p43
    $region27: #{tpu_custom_call.1} parent=1 // pred_check_branch
      %157 = sbr.rel (%p155) target = $region29
    $region28: #{tpu_custom_call.1} parent=1 // pred_region
      %v158 = vld [vmem:[#allocation7] sm:$0xff]
      %v159 = vld [vmem:[#allocation7 + $0x8] sm:$0xff]
      %v160 = vmax.f32 %v158, 0.0
      %v161 = vmax.f32 %v159, 0.0
      %162 = vst [vmem:[#allocation7] sm:$0xff] %v160
      %163 = vst [vmem:[#allocation7 + $0x8] sm:$0xff] %v161
    $region29: #{tpu_custom_call.1} parent=1 // pred_fallthru
      _
    // Predicated region
    $region30: #{tpu_custom_call.1} parent=1 // pred_check
      _
    $region31: #{tpu_custom_call.1} parent=1 // pred_check_branch
      %165 = sbr.rel (0) target = $region33
    $region32: #{tpu_custom_call.1} parent=1 // pred_region
      %s167 = ssub.s32 256, 256
      %168 = vsyncadd [#allocation4], %s167
      %s169 = sshll.u32 [#allocation7], 4
      %s170 = int_to_ptr.vmem [resolvable:$true] %s169
      %175 = dma.vmem_to_hbm [thread:$0]  %s170, 256, %s3, [#allocation4], 128, 128, 8
    $region33: #{tpu_custom_call.1} parent=1 // pred_fallthru
      _
    // Predicated region
    $region34: #{tpu_custom_call.1} parent=1 // pred_check
      _
    $region35: #{tpu_custom_call.1} parent=1 // pred_check_branch
      %177 = sbr.rel (0) target = $region37
    $region36: #{tpu_custom_call.1} parent=1 // pred_region
      %178 = dma.done [#allocation4], 256
    $region37: #{tpu_custom_call.1} parent=1 // pred_fallthru
      _
    %179 = vsyncpa [#allocation3], 1
    %180 = vsyncpa [#allocation6], 1
    %181 = vsyncpa [#allocation4], 1

</llo_original>
